<compile_context>
chip_gen: v7x
topology: tpu7x:2x2x1
jax: 0.10.0
libtpu: 0.0.40
codegen_flags: <defaults>
</compile_context>

<pallas_src>
import jax
import jax.numpy as jnp
from jax import lax
from jax.experimental import pallas as pl
from jax.experimental.pallas import tpu as pltpu

CHN_MID = 32
EPS = 0.1
NEG_SLOPE = 0.2

_TC = 256                   # pixels (lanes) per inner chunk (2 lane-tiles)
_MAX_CHUNKS_PER_BLOCK = 32  # up to 8192 pixels / 32 KiB per input per grid step
_SMALL_B = 512              # below this: a single tiny block


def _round_up(x, m):
    return ((x + m - 1) // m) * m


def _cdiv(a, b):
    return -(-a // b)


def _leaky_relu(x):
    return jnp.maximum(x, NEG_SLOPE * x)


def _make_kernel(n_valid, lblk, tc, needs_mask):
    """Kernel for one grid block of `lblk` pixels, processed in `tc`-pixel chunks."""
    nc = lblk // tc

    def kernel(d0_ref, d1_ref, jd_ref, pk_ref, w2_ref, out_ref):
        pk = pk_ref[...]               # (32, 8) f32 packed small params
        w2t = w2_ref[...]              # (32, 32) f32, pre-transposed (C_out, C_in)

        block_base = pl.program_id(0) * lblk
        lane_iota = jax.lax.broadcasted_iota(jnp.int32, (1, tc), 1)

        def chunk(ci, acc):
            off = pl.multiple_of(ci * tc, tc)
            d0 = d0_ref[:, pl.ds(off, tc)]          # (1, tc) f32
            d1 = d1_ref[:, pl.ds(off, tc)]
            per = (jd_ref[:, pl.ds(off, tc)] + 1.0) * 0.5   # BCE target

            # eps-divisions (exact, on 1-sublane rows -> negligible VALU cost).
            p0 = d0 / (d1 + EPS)
            p1 = d1 / (d0 + EPS)

            # Layer 1 (Conv1x1 5->32) with the d0-d1 feature folded into the
            # weights: 4 broadcast FMAs on the VPU, channels x pixels layout.
            # pk columns: [wA, wB, w1[3], w1[4], b1, b2, w3, b3].
            h1 = (pk[:, 0:1] * d0 + pk[:, 1:2] * d1
                  + pk[:, 2:3] * p0 + pk[:, 3:4] * p1 + pk[:, 4:5])
            h1 = _leaky_relu(h1)                    # (32, tc)

            # Layer 2 (Conv1x1 32->32) on the MXU, f32 in / f32 accumulate.
            h2 = jnp.dot(w2t, h1, preferred_element_type=jnp.float32)
            h2 = _leaky_relu(h2 + pk[:, 5:6])       # (32, tc)

            # Layer 3 (Conv1x1 32->1): small sublane reduction.
            z = jnp.sum(pk[:, 6:7] * h2, axis=0, keepdims=True) + pk[0:1, 7:8]

            # Sigmoid + BCELoss fused as BCE-with-logits: softplus(z) - per*z.
            bce = (jnp.maximum(z, 0.0)
                   + jnp.log(1.0 + jnp.exp(-jnp.abs(z)))
                   - per * z)

            if needs_mask:
                idx = lane_iota + (block_base + off)
                bce = jnp.where(idx < n_valid, bce, 0.0)
            return acc + bce

        acc = lax.fori_loop(0, nc, chunk, jnp.zeros((1, tc), jnp.float32),
                            unroll=min(2, nc))

        # One partial sum per grid step, lane-broadcast into a (1, 128) block.
        s = jnp.sum(acc, axis=1, keepdims=True)     # (1, 1)
        out_ref[...] = jnp.broadcast_to(s, (1, 128))

    return kernel


def _pack_params(params):
    """Fold the d0-d1 feature into layer-1 weights and pack small params."""
    w1, b1, w2, b2, w3, b3 = params
    w_a = w1[0] + w1[2]
    w_b = w1[1] - w1[2]
    pk = jnp.stack(
        [w_a, w_b, w1[3], w1[4], b1, b2, w3,
         jnp.full((CHN_MID,), b3, jnp.float32)],
        axis=1).astype(jnp.float32)                 # (32, 8)
    w2t = w2.T.astype(jnp.float32)                  # (32, 32)
    return pk, w2t


def _choose_blocking(B):
    """Return (grid, nc, tc): grid blocks, each nc chunks of tc lanes."""
    if B <= _SMALL_B:
        tc = max(128, _round_up(B, 128))
        return 1, 1, tc
    tc = _TC
    n_chunks = _cdiv(B, tc)
    grid = max(2, _cdiv(n_chunks, _MAX_CHUNKS_PER_BLOCK))   # >=2 keeps v7x's 2nd TC busy
    nc = _cdiv(n_chunks, grid)
    return grid, nc, tc


@jax.jit
def bce_ranking_loss(d0, d1, judge, params):
    """BCERankingLoss.forward: d0, d1, judge of shape (B,) or (B, 1); returns scalar."""
    d0f = d0.reshape(-1).astype(jnp.float32)
    d1f = d1.reshape(-1).astype(jnp.float32)
    jdf = judge.reshape(-1).astype(jnp.float32)
    B = d0f.shape[0]

    grid, nc, tc = _choose_blocking(B)
    lblk = nc * tc
    mp = grid * lblk
    pad = mp - B

    # Zero padding is safe: 0/(0+0.1) is finite and padded lanes are masked
    # out of the BCE sum in-kernel.
    d0p = jnp.pad(d0f, (0, pad)).reshape(1, mp)
    d1p = jnp.pad(d1f, (0, pad)).reshape(1, mp)
    jdp = jnp.pad(jdf, (0, pad)).reshape(1, mp)

    pk, w2t = _pack_params(params)

    row_spec = pl.BlockSpec((1, lblk), lambda i: (0, i))
    const = lambda shape: pl.BlockSpec(shape, lambda i: (0, 0))

    partials = pl.pallas_call(
        _make_kernel(B, lblk, tc, needs_mask=(pad > 0)),
        out_shape=jax.ShapeDtypeStruct((1, grid * 128), jnp.float32),
        grid_spec=pltpu.PrefetchScalarGridSpec(
            num_scalar_prefetch=0,
            grid=(grid,),
            in_specs=[
                row_spec,                       # d0    (1, lblk)
                row_spec,                       # d1    (1, lblk)
                row_spec,                       # judge (1, lblk)
                const((CHN_MID, 8)),            # packed f32 params
                const((CHN_MID, CHN_MID)),      # w2^T (f32)
            ],
            out_specs=pl.BlockSpec((1, 128), lambda i: (0, i)),
        ),
        compiler_params=pltpu.CompilerParams(
            dimension_semantics=("parallel",)),
    )(d0p, d1p, jdp, pk, w2t)

    # Each block broadcasts the same partial sum into all 128 lanes.
    return jnp.sum(partials) / (128.0 * B)


def init_params(key, chn_mid=CHN_MID):
    """Deterministic synthetic init. w1: (C_in=5, C_out), w2: (C_in, C_out), w3: (C_in,)."""
    k1, k2, k3, k4, k5, k6 = jax.random.split(key, 6)
    w1 = jax.random.normal(k1, (5, chn_mid), jnp.float32) * 0.2
    b1 = jax.random.normal(k2, (chn_mid,), jnp.float32) * 0.05
    w2 = jax.random.normal(k3, (chn_mid, chn_mid), jnp.float32) * 0.1
    b2 = jax.random.normal(k4, (chn_mid,), jnp.float32) * 0.05
    w3 = jax.random.normal(k5, (chn_mid,), jnp.float32) * 0.1
    b3 = jax.random.normal(k6, (), jnp.float32) * 0.05
    return (w1, b1, w2, b2, w3, b3)


def reference_loss(d0, d1, judge, params, eps=EPS):
    """Pure-JAX faithful translation of the PyTorch module (f32, exact divisions)."""
    w1, b1, w2, b2, w3, b3 = params
    d0c = d0.reshape(-1, 1)
    d1c = d1.reshape(-1, 1)
    per = (judge.reshape(-1, 1) + 1.0) / 2.0
    x = jnp.concatenate(
        [d0c, d1c, d0c - d1c, d0c / (d1c + eps), d1c / (d0c + eps)], axis=1)
    h = x @ w1 + b1
    h = jnp.where(h >= 0, h, NEG_SLOPE * h)
    h = h @ w2 + b2
    h = jnp.where(h >= 0, h, NEG_SLOPE * h)
    p = jax.nn.sigmoid(h @ w3[:, None] + b3)
    bce = -(per * jnp.log(p) + (1.0 - per) * jnp.log(1.0 - p))
    return jnp.mean(bce)


if __name__ == "__main__":
    key = jax.random.PRNGKey(0)
    kp, k0, k1, kj = jax.random.split(key, 4)
    params = init_params(kp)

    # Small shapes consistent with BCERankingLoss.forward: d0/d1/judge are (B, 1).
    B = 16
    d0 = jax.random.uniform(k0, (B, 1), jnp.float32)
    d1 = jax.random.uniform(k1, (B, 1), jnp.float32)
    judge = jax.random.uniform(kj, (B, 1), jnp.float32, minval=-1.0, maxval=1.0)

    loss = jax.block_until_ready(bce_ranking_loss(d0, d1, judge, params))
    ref = reference_loss(d0, d1, judge, params)

    assert loss.shape == ()
    assert bool(jnp.isfinite(loss))
    # matmul default-precision differences between kernel and reference on TPU.
    assert jnp.allclose(loss, ref, atol=5e-3, rtol=5e-3), \
        f"kernel {float(loss)} vs reference {float(ref)}"

    # Larger ragged case exercising a multi-block grid, the fori_loop chunking
    # and the padding mask.
    B2 = 4000
    k0b, k1b, kjb = jax.random.split(jax.random.PRNGKey(1), 3)
    d0b = jax.random.uniform(k0b, (B2, 1), jnp.float32)
    d1b = jax.random.uniform(k1b, (B2, 1), jnp.float32)
    jdb = jax.random.uniform(kjb, (B2, 1), jnp.float32, minval=-1.0, maxval=1.0)
    loss2 = jax.block_until_ready(bce_ranking_loss(d0b, d1b, jdb, params))
    ref2 = reference_loss(d0b, d1b, jdb, params)
    assert jnp.allclose(loss2, ref2, atol=5e-3, rtol=5e-3), \
        f"kernel {float(loss2)} vs reference {float(ref2)}"

    print("KERNEL_OK")
</pallas_src>

<mosaic_0001>
module attributes {stable_mosaic.version = 11 : i64} {
  func.func @kernel(%arg0: i32, %arg1: memref<1x128xf32, #tpu.memory_space<vmem>>, %arg2: memref<1x128xf32, #tpu.memory_space<vmem>>, %arg3: memref<1x128xf32, #tpu.memory_space<vmem>>, %arg4: memref<32x8xf32, #tpu.memory_space<vmem>>, %arg5: memref<32x32xf32, #tpu.memory_space<vmem>>, %arg6: memref<1x128xf32, #tpu.memory_space<vmem>>) attributes {dimension_semantics = [#tpu.dimension_semantics<parallel>], iteration_bounds = array<i64: 1>, scalar_prefetch = 0 : i64, scratch_operands = 0 : i64, tpu.core_type = #tpu.core_type<tc>, window_params = [{transform_indices = @transform_0, window_bounds = array<i64: 1, 128>}, {transform_indices = @transform_1, window_bounds = array<i64: 1, 128>}, {transform_indices = @transform_2, window_bounds = array<i64: 1, 128>}, {pipeline_mode = #tpu.pipeline_mode<synchronous>, transform_indices = @transform_3, window_bounds = array<i64: 32, 8>}, {pipeline_mode = #tpu.pipeline_mode<synchronous>, transform_indices = @transform_4, window_bounds = array<i64: 32, 32>}, {transform_indices = @transform_5, window_bounds = array<i64: 1, 128>}]} {
    %c0 = arith.constant 0 : index
    %c0_0 = arith.constant 0 : index
    %0 = vector.load %arg4[%c0, %c0_0] : memref<32x8xf32, #tpu.memory_space<vmem>>, vector<32x8xf32>
    %c0_1 = arith.constant 0 : index
    %c0_2 = arith.constant 0 : index
    %1 = vector.load %arg5[%c0_1, %c0_2] : memref<32x32xf32, #tpu.memory_space<vmem>>, vector<32x32xf32>
    %c128_i32 = arith.constant 128 : i32
    %2 = arith.muli %arg0, %c128_i32 : i32
    %3 = tpu.iota {dimensions = array<i32: 1>} : vector<1x128xi32>
    %cst = arith.constant 0.000000e+00 : f32
    %4 = vector.broadcast %cst : f32 to vector<1x128xf32>
    %c0_i32 = arith.constant 0 : i32
    %c128_i32_3 = arith.constant 128 : i32
    %5 = arith.muli %c0_i32, %c128_i32_3 : i32
    %6 = tpu.assume_multiple %5, 128 : i32
    %c0_4 = arith.constant 0 : index
    %7 = arith.index_cast %6 : i32 to index
    %8 = vector.load %arg1[%c0_4, %7] : memref<1x128xf32, #tpu.memory_space<vmem>>, vector<1x128xf32>
    %c0_5 = arith.constant 0 : index
    %9 = arith.index_cast %6 : i32 to index
    %10 = vector.load %arg2[%c0_5, %9] : memref<1x128xf32, #tpu.memory_space<vmem>>, vector<1x128xf32>
    %c0_6 = arith.constant 0 : index
    %11 = arith.index_cast %6 : i32 to index
    %12 = vector.load %arg3[%c0_6, %11] : memref<1x128xf32, #tpu.memory_space<vmem>>, vector<1x128xf32>
    %cst_7 = arith.constant 1.000000e+00 : f32
    %13 = vector.broadcast %cst_7 : f32 to vector<1x128xf32>
    %14 = arith.addf %12, %13 : vector<1x128xf32>
    %cst_8 = arith.constant 5.000000e-01 : f32
    %15 = vector.broadcast %cst_8 : f32 to vector<1x128xf32>
    %16 = arith.mulf %14, %15 : vector<1x128xf32>
    %cst_9 = arith.constant 1.000000e-01 : f32
    %17 = vector.broadcast %cst_9 : f32 to vector<1x128xf32>
    %18 = arith.addf %10, %17 : vector<1x128xf32>
    %19 = arith.divf %8, %18 : vector<1x128xf32>
    %cst_10 = arith.constant 1.000000e-01 : f32
    %20 = vector.broadcast %cst_10 : f32 to vector<1x128xf32>
    %21 = arith.addf %8, %20 : vector<1x128xf32>
    %22 = arith.divf %10, %21 : vector<1x128xf32>
    %23 = vector.extract_strided_slice %0 {offsets = [0, 0], sizes = [32, 1], strides = [1, 1]} : vector<32x8xf32> to vector<32x1xf32>
    %24 = vector.broadcast %23 : vector<32x1xf32> to vector<32x128xf32>
    %25 = vector.broadcast %8 : vector<1x128xf32> to vector<32x128xf32>
    %26 = arith.mulf %24, %25 : vector<32x128xf32>
    %27 = vector.extract_strided_slice %0 {offsets = [0, 1], sizes = [32, 1], strides = [1, 1]} : vector<32x8xf32> to vector<32x1xf32>
    %28 = vector.broadcast %27 : vector<32x1xf32> to vector<32x128xf32>
    %29 = vector.broadcast %10 : vector<1x128xf32> to vector<32x128xf32>
    %30 = arith.mulf %28, %29 : vector<32x128xf32>
    %31 = arith.addf %26, %30 : vector<32x128xf32>
    %32 = vector.extract_strided_slice %0 {offsets = [0, 2], sizes = [32, 1], strides = [1, 1]} : vector<32x8xf32> to vector<32x1xf32>
    %33 = vector.broadcast %32 : vector<32x1xf32> to vector<32x128xf32>
    %34 = vector.broadcast %19 : vector<1x128xf32> to vector<32x128xf32>
    %35 = arith.mulf %33, %34 : vector<32x128xf32>
    %36 = arith.addf %31, %35 : vector<32x128xf32>
    %37 = vector.extract_strided_slice %0 {offsets = [0, 3], sizes = [32, 1], strides = [1, 1]} : vector<32x8xf32> to vector<32x1xf32>
    %38 = vector.broadcast %37 : vector<32x1xf32> to vector<32x128xf32>
    %39 = vector.broadcast %22 : vector<1x128xf32> to vector<32x128xf32>
    %40 = arith.mulf %38, %39 : vector<32x128xf32>
    %41 = arith.addf %36, %40 : vector<32x128xf32>
    %42 = vector.extract_strided_slice %0 {offsets = [0, 4], sizes = [32, 1], strides = [1, 1]} : vector<32x8xf32> to vector<32x1xf32>
    %43 = vector.broadcast %42 : vector<32x1xf32> to vector<32x128xf32>
    %44 = arith.addf %41, %43 : vector<32x128xf32>
    %cst_11 = arith.constant 2.000000e-01 : f32
    %45 = vector.broadcast %cst_11 : f32 to vector<32x128xf32>
    %46 = arith.mulf %45, %44 : vector<32x128xf32>
    %47 = arith.maximumf %44, %46 : vector<32x128xf32>
    %cst_12 = arith.constant dense<0.000000e+00> : vector<32x128xf32>
    %48 = tpu.matmul %1, %47, %cst_12 {dimension_numbers = #tpu.dot_dimension_numbers<[1], [0], [0], [1], [0, 0, 1, 1], [], []>} : vector<32x32xf32>, vector<32x128xf32>, vector<32x128xf32> -> vector<32x128xf32>
    %49 = vector.extract_strided_slice %0 {offsets = [0, 5], sizes = [32, 1], strides = [1, 1]} : vector<32x8xf32> to vector<32x1xf32>
    %50 = vector.broadcast %49 : vector<32x1xf32> to vector<32x128xf32>
    %51 = arith.addf %48, %50 : vector<32x128xf32>
    %cst_13 = arith.constant 2.000000e-01 : f32
    %52 = vector.broadcast %cst_13 : f32 to vector<32x128xf32>
    %53 = arith.mulf %52, %51 : vector<32x128xf32>
    %54 = arith.maximumf %51, %53 : vector<32x128xf32>
    %55 = vector.extract_strided_slice %0 {offsets = [0, 6], sizes = [32, 1], strides = [1, 1]} : vector<32x8xf32> to vector<32x1xf32>
    %56 = vector.broadcast %55 : vector<32x1xf32> to vector<32x128xf32>
    %57 = arith.mulf %56, %54 : vector<32x128xf32>
    %cst_14 = arith.constant dense<0.000000e+00> : vector<128xf32>
    %58 = vector.multi_reduction <add>, %57, %cst_14 [0] : vector<32x128xf32> to vector<128xf32>
    %59 = vector.shape_cast %58 : vector<128xf32> to vector<1x128xf32>
    %60 = vector.extract_strided_slice %0 {offsets = [0, 7], sizes = [1, 1], strides = [1, 1]} : vector<32x8xf32> to vector<1x1xf32>
    %61 = vector.broadcast %60 : vector<1x1xf32> to vector<1x128xf32>
    %62 = arith.addf %59, %61 : vector<1x128xf32>
    %cst_15 = arith.constant 0.000000e+00 : f32
    %63 = vector.broadcast %cst_15 : f32 to vector<1x128xf32>
    %64 = arith.maximumf %62, %63 : vector<1x128xf32>
    %65 = math.absf %62 : vector<1x128xf32>
    %cst_16 = arith.constant 0.000000e+00 : f32
    %66 = vector.broadcast %cst_16 : f32 to vector<1x128xf32>
    %67 = arith.subf %66, %65 : vector<1x128xf32>
    %68 = math.exp %67 : vector<1x128xf32>
    %cst_17 = arith.constant 1.000000e+00 : f32
    %69 = vector.broadcast %cst_17 : f32 to vector<1x128xf32>
    %70 = arith.addf %69, %68 : vector<1x128xf32>
    %71 = math.log %70 : vector<1x128xf32>
    %72 = arith.addf %64, %71 : vector<1x128xf32>
    %73 = arith.mulf %16, %62 : vector<1x128xf32>
    %74 = arith.subf %72, %73 : vector<1x128xf32>
    %75 = arith.addi %2, %6 : i32
    %76 = vector.broadcast %75 : i32 to vector<1x128xi32>
    %77 = arith.addi %3, %76 : vector<1x128xi32>
    %c16_i32 = arith.constant 16 : i32
    %78 = vector.broadcast %c16_i32 : i32 to vector<1x128xi32>
    %79 = arith.cmpi slt, %77, %78 : vector<1x128xi32>
    %cst_18 = arith.constant 0.000000e+00 : f32
    %80 = vector.broadcast %cst_18 : f32 to vector<1x128xf32>
    %81 = arith.select %79, %74, %80 : vector<1x128xi1>, vector<1x128xf32>
    %82 = arith.addf %4, %81 : vector<1x128xf32>
    %c1_i32 = arith.constant 1 : i32
    %cst_19 = arith.constant dense<0.000000e+00> : vector<1xf32>
    %83 = vector.multi_reduction <add>, %82, %cst_19 [1] : vector<1x128xf32> to vector<1xf32>
    %84 = vector.shape_cast %83 : vector<1xf32> to vector<1x1xf32>
    %85 = vector.shape_cast %84 : vector<1x1xf32> to vector<1x1xf32>
    %86 = vector.broadcast %85 : vector<1x1xf32> to vector<1x128xf32>
    %c0_20 = arith.constant 0 : index
    %c0_21 = arith.constant 0 : index
    %87 = vector.load %arg6[%c0_20, %c0_21] : memref<1x128xf32, #tpu.memory_space<vmem>>, vector<1x128xf32>
    tpu.vector_store %arg6[%c0_20, %c0_21], %86 {strides = array<i32>} : memref<1x128xf32, #tpu.memory_space<vmem>>, vector<1x128xf32>,
    return
  }
  func.func @transform_0(%arg0: i32) -> (i32, i32) {
    %c0_i32 = arith.constant 0 : i32
    %c0_i32_0 = arith.constant 0 : i32
    return %c0_i32, %arg0 : i32, i32
  }
  func.func @transform_1(%arg0: i32) -> (i32, i32) {
    %c0_i32 = arith.constant 0 : i32
    %c0_i32_0 = arith.constant 0 : i32
    return %c0_i32, %arg0 : i32, i32
  }
  func.func @transform_2(%arg0: i32) -> (i32, i32) {
    %c0_i32 = arith.constant 0 : i32
    %c0_i32_0 = arith.constant 0 : i32
    return %c0_i32, %arg0 : i32, i32
  }
  func.func @transform_3(%arg0: i32) -> (i32, i32) {
    %c0_i32 = arith.constant 0 : i32
    %c0_i32_0 = arith.constant 0 : i32
    %c0_i32_1 = arith.constant 0 : i32
    return %c0_i32, %c0_i32_0 : i32, i32
  }
  func.func @transform_4(%arg0: i32) -> (i32, i32) {
    %c0_i32 = arith.constant 0 : i32
    %c0_i32_0 = arith.constant 0 : i32
    %c0_i32_1 = arith.constant 0 : i32
    return %c0_i32, %c0_i32_0 : i32, i32
  }
  func.func @transform_5(%arg0: i32) -> (i32, i32) {
    %c0_i32 = arith.constant 0 : i32
    %c0_i32_0 = arith.constant 0 : i32
    return %c0_i32, %arg0 : i32, i32
  }
}

</mosaic_0001>

<llo_original>
// kernel: bce_ranking_loss.1
$region0: #{bce_ranking_loss.1}
  #allocation0 [shape = 'u32[]', space=smem, size = 0x4, offset = 0x4, fixed_abs, tag = 'smem constant byte address 0x4 - core index']
  #allocation1 [shape = 'u32[144,128]{1,0:T(1,128)}', space=vmem, size = 0x12000, scoped, tag = 'internal scratch']
  %s0 = inlined_call_operand.vmem [shape: f32[1,128], index: 0, kind: input, shape index: {}]
  %s1 = inlined_call_operand.vmem [shape: f32[1,128], index: 1, kind: input, shape index: {}]
  %s2 = inlined_call_operand.vmem [shape: f32[1,128], index: 2, kind: input, shape index: {}]
  %s3 = inlined_call_operand.vmem [shape: f32[32,8], index: 3, kind: input, shape index: {}]
  %s4 = inlined_call_operand.vmem [shape: f32[32,32], index: 4, kind: input, shape index: {}]
  %s5 = inlined_call_operand.vmem [shape: f32[1,128], index: 5, kind: output, shape index: {}]
  %s6 = sld [smem:[#allocation0]]
  $region30: #{bce_ranking_loss.1} parent=0
    _
  %s8 = ssub.s32 1, %s6
  %s9 = scalar_select 0, %s8, %s6
  // Predicated region
  $region2: #{bce_ranking_loss.1} parent=0 // pred_check
    _
  $region3: #{bce_ranking_loss.1} parent=0 // pred_check_branch
    %11 = sbr.rel (0) target = $region5
  $region4: #{bce_ranking_loss.1} parent=0 // pred_region
    _
  $region5: #{bce_ranking_loss.1} parent=0 // pred_fallthru
    _
  // Predicated region
  $region6: #{bce_ranking_loss.1} parent=0 // pred_check
    _
  $region7: #{bce_ranking_loss.1} parent=0 // pred_check_branch
    %13 = sbr.rel (0) target = $region9
  $region8: #{bce_ranking_loss.1} parent=0 // pred_region
    _
  $region9: #{bce_ranking_loss.1} parent=0 // pred_fallthru
    _
  // Predicated region
  $region10: #{bce_ranking_loss.1} parent=0 // pred_check
    _
  $region11: #{bce_ranking_loss.1} parent=0 // pred_check_branch
    %15 = sbr.rel (0) target = $region13
  $region12: #{bce_ranking_loss.1} parent=0 // pred_region
    _
  $region13: #{bce_ranking_loss.1} parent=0 // pred_fallthru
    _
  // Predicated region
  $region14: #{bce_ranking_loss.1} parent=0 // pred_check
    _
  $region15: #{bce_ranking_loss.1} parent=0 // pred_check_branch
    %17 = sbr.rel (0) target = $region17
  $region16: #{bce_ranking_loss.1} parent=0 // pred_region
    _
  $region17: #{bce_ranking_loss.1} parent=0 // pred_fallthru
    _
  // Predicated region
  $region18: #{bce_ranking_loss.1} parent=0 // pred_check
    _
  $region19: #{bce_ranking_loss.1} parent=0 // pred_check_branch
    %19 = sbr.rel (0) target = $region21
  $region20: #{bce_ranking_loss.1} parent=0 // pred_region
    _
  $region21: #{bce_ranking_loss.1} parent=0 // pred_fallthru
    _
  %v20 = vld [vmem:[%s3] sm:$0xff]
  %v21 = vld [vmem:[%s3 + $0x8] sm:$0xff]
  %v22 = vld [vmem:[%s3 + $0x10] sm:$0xff]
  %v23 = vld [vmem:[%s3 + $0x18] sm:$0xff]
  %v24 = vld [vmem:[%s4] sm:$0xff]
  %v25 = vld [vmem:[%s4 + $0x8] sm:$0xff]
  %v26 = vld [vmem:[%s4 + $0x10] sm:$0xff]
  %v27 = vld [vmem:[%s4 + $0x18] sm:$0xff]
  %s28 = smul.u32 0, 128
  %v29 = vlaneseq
  %v30 = vand.u32 %v29, 127
  %v31 = vld [vmem:[%s0] sm:$0x1]
  %v32 = vld [vmem:[%s1] sm:$0x1]
  %v33 = vld [vmem:[%s2] sm:$0x1]
  %v34 = vadd.f32 %v33, 1.0
  %v35 = vmul.f32 %v34, 0.5
  %v36 = vadd.f32 %v32, 0.1
  %v37 = vrcp.pop %v36
  %v38 = vmul.f32 %v31, %v37
  %v39 = vadd.f32 %v31, 0.1
  %v40 = vrcp.pop %v39
  %v41 = vmul.f32 %v32, %v40
  %43 = vset.pattern.permute.xlu0 0
  %44 = vperm.xlu0 %43, %v20
  %v45 = vpop.permute.xlu0 %44
  %48 = vset.pattern.permute.xlu0 0
  %49 = vperm.xlu0 %48, %v21
  %v50 = vpop.permute.xlu0 %49
  %53 = vset.pattern.permute.xlu0 0
  %54 = vperm.xlu0 %53, %v22
  %v55 = vpop.permute.xlu0 %54
  %58 = vset.pattern.permute.xlu0 0
  %59 = vperm.xlu0 %58, %v23
  %v60 = vpop.permute.xlu0 %59
  %v63 = vlaneseq
  %v64 = vshrl.u32 %v63, 7
  %v65 = vsub.s32 0, %v64
  %v66 = vrot.slane %v31, %v65
  %v68 = vmul.f32 %v45, %v66
  %v69 = vmul.f32 %v50, %v66
  %v70 = vmul.f32 %v55, %v66
  %v71 = vmul.f32 %v60, %v66
  %72 = vset.pattern.permute.xlu0 1
  %73 = vperm.xlu0 %72, %v20
  %v74 = vpop.permute.xlu0 %73
  %76 = vset.pattern.permute.xlu0 1
  %77 = vperm.xlu0 %76, %v21
  %v78 = vpop.permute.xlu0 %77
  %80 = vset.pattern.permute.xlu0 1
  %81 = vperm.xlu0 %80, %v22
  %v82 = vpop.permute.xlu0 %81
  %84 = vset.pattern.permute.xlu0 1
  %85 = vperm.xlu0 %84, %v23
  %v86 = vpop.permute.xlu0 %85
  %v89 = vlaneseq
  %v90 = vshrl.u32 %v89, 7
  %v91 = vsub.s32 0, %v90
  %v92 = vrot.slane %v32, %v91
  %v94 = vmul.f32 %v74, %v92
  %v95 = vmul.f32 %v78, %v92
  %v96 = vmul.f32 %v82, %v92
  %v97 = vmul.f32 %v86, %v92
  %v98 = vadd.f32 %v68, %v94
  %v99 = vadd.f32 %v69, %v95
  %v100 = vadd.f32 %v70, %v96
  %v101 = vadd.f32 %v71, %v97
  %102 = vset.pattern.permute.xlu0 2
  %103 = vperm.xlu0 %102, %v20
  %v104 = vpop.permute.xlu0 %103
  %106 = vset.pattern.permute.xlu0 2
  %107 = vperm.xlu0 %106, %v21
  %v108 = vpop.permute.xlu0 %107
  %110 = vset.pattern.permute.xlu0 2
  %111 = vperm.xlu0 %110, %v22
  %v112 = vpop.permute.xlu0 %111
  %114 = vset.pattern.permute.xlu0 2
  %115 = vperm.xlu0 %114, %v23
  %v116 = vpop.permute.xlu0 %115
  %v119 = vlaneseq
  %v120 = vshrl.u32 %v119, 7
  %v121 = vsub.s32 0, %v120
  %v122 = vrot.slane %v38, %v121
  %v124 = vmul.f32 %v104, %v122
  %v125 = vmul.f32 %v108, %v122
  %v126 = vmul.f32 %v112, %v122
  %v127 = vmul.f32 %v116, %v122
  %v128 = vadd.f32 %v98, %v124
  %v129 = vadd.f32 %v99, %v125
  %v130 = vadd.f32 %v100, %v126
  %v131 = vadd.f32 %v101, %v127
  %132 = vset.pattern.permute.xlu0 3
  %133 = vperm.xlu0 %132, %v20
  %v134 = vpop.permute.xlu0 %133
  %136 = vset.pattern.permute.xlu0 3
  %137 = vperm.xlu0 %136, %v21
  %v138 = vpop.permute.xlu0 %137
  %140 = vset.pattern.permute.xlu0 3
  %141 = vperm.xlu0 %140, %v22
  %v142 = vpop.permute.xlu0 %141
  %144 = vset.pattern.permute.xlu0 3
  %145 = vperm.xlu0 %144, %v23
  %v146 = vpop.permute.xlu0 %145
  %v149 = vlaneseq
  %v150 = vshrl.u32 %v149, 7
  %v151 = vsub.s32 0, %v150
  %v152 = vrot.slane %v41, %v151
  %v154 = vmul.f32 %v134, %v152
  %v155 = vmul.f32 %v138, %v152
  %v156 = vmul.f32 %v142, %v152
  %v157 = vmul.f32 %v146, %v152
  %v158 = vadd.f32 %v128, %v154
  %v159 = vadd.f32 %v129, %v155
  %v160 = vadd.f32 %v130, %v156
  %v161 = vadd.f32 %v131, %v157
  %162 = vset.pattern.permute.xlu0 4
  %163 = vperm.xlu0 %162, %v20
  %v164 = vpop.permute.xlu0 %163
  %166 = vset.pattern.permute.xlu0 4
  %167 = vperm.xlu0 %166, %v21
  %v168 = vpop.permute.xlu0 %167
  %170 = vset.pattern.permute.xlu0 4
  %171 = vperm.xlu0 %170, %v22
  %v172 = vpop.permute.xlu0 %171
  %174 = vset.pattern.permute.xlu0 4
  %175 = vperm.xlu0 %174, %v23
  %v176 = vpop.permute.xlu0 %175
  %v178 = vadd.f32 %v158, %v164
  %v179 = vadd.f32 %v159, %v168
  %v180 = vadd.f32 %v160, %v172
  %v181 = vadd.f32 %v161, %v176
  %v182 = vmul.f32 %v178, 0.2
  %v183 = vmul.f32 %v179, 0.2
  %v184 = vmul.f32 %v180, 0.2
  %v185 = vmul.f32 %v181, 0.2
  %v186 = vmax.f32 %v178, %v182
  %v187 = vmax.f32 %v179, %v183
  %v188 = vmax.f32 %v180, %v184
  %v189 = vmax.f32 %v181, %v185
  %190 = vset.pattern.permute.xlu0 5
  %191 = vperm.xlu0 %190, %v20
  %v192 = vpop.permute.xlu0 %191
  %194 = vset.pattern.permute.xlu0 5
  %195 = vperm.xlu0 %194, %v21
  %v196 = vpop.permute.xlu0 %195
  %198 = vset.pattern.permute.xlu0 5
  %199 = vperm.xlu0 %198, %v22
  %v200 = vpop.permute.xlu0 %199
  %202 = vset.pattern.permute.xlu0 5
  %203 = vperm.xlu0 %202, %v23
  %v204 = vpop.permute.xlu0 %203
  %vm206 = vcmask 261120
  %v208 = vsel %vm206, %v24, 0
  %v211 = vsel %vm206, %v25, 0
  %v214 = vsel %vm206, %v26, 0
  %v217 = vsel %vm206, %v27, 0
  %219 = vmatprep.subr.mxu0 0.0
  %220 = vmatpush1.msra.mxu0 %v186
  %221 = vmatprep.subr.mxu0 0.0
  %222 = vmatpush1.msra.mxu0 %v187
  %223 = vmatprep.subr.mxu0 0.0
  %224 = vmatpush1.msra.mxu0 %v188
  %225 = vmatprep.subr.mxu0 0.0
  %226 = vmatpush1.msra.mxu0 %v189
  %227 = vmatprep.subr.mxu0 0.0
  %228 = vmatpush1.msra.mxu0 0.0
  %229 = vmatprep.subr.mxu0 0.0
  %230 = vmatpush1.msra.mxu0 0.0
  %231 = vmatprep.subr.mxu0 0.0
  %232 = vmatpush1.msra.mxu0 0.0
  %233 = vmatprep.subr.mxu0 0.0
  %234 = vmatpush1.msra.mxu0 0.0
  %235 = vmatprep.subr.mxu0 0.0
  %236 = vmatpush1.msra.mxu0 0.0
  %237 = vmatprep.subr.mxu0 0.0
  %238 = vmatpush1.msra.mxu0 0.0
  %239 = vmatprep.subr.mxu0 0.0
  %240 = vmatpush1.msra.mxu0 0.0
  %241 = vmatprep.subr.mxu0 0.0
  %242 = vmatpush1.msra.mxu0 0.0
  %243 = vmatprep.subr.mxu0 0.0
  %244 = vmatpush1.msra.mxu0 0.0
  %245 = vmatprep.subr.mxu0 0.0
  %246 = vmatpush1.msra.mxu0 0.0
  %247 = vmatprep.subr.mxu0 0.0
  %248 = vmatpush1.msra.mxu0 0.0
  %249 = vmatprep.subr.mxu0 0.0
  %250 = vmatpush1.msra.mxu0 0.0
  %251 = vmatprep.subr.mxu0 0.0
  %252 = vmatpush1.msra.mxu0 0.0
  %253 = vmatprep.subr.mxu0 0.0
  %254 = vmatpush1.msra.mxu0 0.0
  %255 = vmatprep.subr.mxu0 0.0
  %256 = vmatpush1.msra.mxu0 0.0
  %257 = vmatprep.subr.mxu0 0.0
  %258 = vmatpush1.msra.mxu0 0.0
  %259 = vmatprep.subr.mxu0 0.0
  %260 = vmatpush1.msra.mxu0 0.0
  %261 = vmatprep.subr.mxu0 0.0
  %262 = vmatpush1.msra.mxu0 0.0
  %263 = vmatprep.subr.mxu0 0.0
  %264 = vmatpush1.msra.mxu0 0.0
  %265 = vmatprep.subr.mxu0 0.0
  %266 = vmatpush1.msra.mxu0 0.0
  %267 = vmatprep.subr.mxu0 0.0
  %268 = vmatpush1.msra.mxu0 0.0
  %269 = vmatprep.subr.mxu0 0.0
  %270 = vmatpush1.msra.mxu0 0.0
  %271 = vmatprep.subr.mxu0 0.0
  %272 = vmatpush1.msra.mxu0 0.0
  %273 = vmatprep.subr.mxu0 0.0
  %274 = vmatpush1.msra.mxu0 0.0
  %275 = vmatprep.subr.mxu0 0.0
  %276 = vmatpush1.msra.mxu0 0.0
  %277 = vmatprep.subr.mxu0 0.0
  %278 = vmatpush1.msra.mxu0 0.0
  %279 = vmatprep.subr.mxu0 0.0
  %280 = vmatpush1.msra.mxu0 0.0
  %281 = vmatprep.subr.mxu0 0.0
  %282 = vmatpush1.msra.mxu0 0.0
  %283 = vmatprep.mubr.f32.mxu0 0.0
  %284 = vmatmul.mubr.f32.gmra.mrb[0].mxu0 %v208
  %v285 = vpop.f32.mrb[0].mxu0
  %v286 = vadd.f32 %v192, %v285
  %v287 = vpop.f32.mrb[0].mxu0
  %288 = vmatprep.mubr.f32.mxu0 0.0
  %289 = vmatmul.mubr.f32.gmra.mrb[0].mxu0 %v211
  %v290 = vpop.f32.mrb[0].mxu0
  %v291 = vadd.f32 %v196, %v290
  %v292 = vpop.f32.mrb[0].mxu0
  %293 = vmatprep.mubr.f32.mxu0 0.0
  %294 = vmatmul.mubr.f32.gmra.mrb[0].mxu0 %v214
  %v295 = vpop.f32.mrb[0].mxu0
  %v296 = vadd.f32 %v200, %v295
  %v297 = vpop.f32.mrb[0].mxu0
  %298 = vmatprep.mubr.f32.mxu0 0.0
  %299 = vmatmul.mubr.f32.gmra.mrb[0].mxu0 %v217
  %v300 = vpop.f32.mrb[0].mxu0
  %v301 = vadd.f32 %v204, %v300
  %v302 = vpop.f32.mrb[0].mxu0
  %303 = vdwg.mxu0
  %v304 = vmul.f32 %v286, 0.2
  %v305 = vmul.f32 %v291, 0.2
  %v306 = vmul.f32 %v296, 0.2
  %v307 = vmul.f32 %v301, 0.2
  %v308 = vmax.f32 %v286, %v304
  %v309 = vmax.f32 %v291, %v305
  %v310 = vmax.f32 %v296, %v306
  %v311 = vmax.f32 %v301, %v307
  %312 = vset.pattern.permute.xlu0 6
  %313 = vperm.xlu0 %312, %v20
  %v314 = vpop.permute.xlu0 %313
  %316 = vset.pattern.permute.xlu0 6
  %317 = vperm.xlu0 %316, %v21
  %v318 = vpop.permute.xlu0 %317
  %320 = vset.pattern.permute.xlu0 6
  %321 = vperm.xlu0 %320, %v22
  %v322 = vpop.permute.xlu0 %321
  %324 = vset.pattern.permute.xlu0 6
  %325 = vperm.xlu0 %324, %v23
  %v326 = vpop.permute.xlu0 %325
  %v328 = vmul.f32 %v314, %v308
  %v329 = vmul.f32 %v318, %v309
  %v330 = vmul.f32 %v322, %v310
  %v331 = vmul.f32 %v326, %v311
  %v332 = vadd.f32 %v328, %v329
  %v333 = vadd.f32 %v332, %v330
  %v334 = vadd.f32 %v333, %v331
  %v335 = vrot.slane %v334, 4
  %v336 = vadd.f32 %v334, %v335
  %v337 = vrot.slane %v336, 2
  %v338 = vadd.f32 %v336, %v337
  %v339 = vrot.slane %v338, 1
  %v340 = vadd.f32 %v338, %v339
  %341 = vset.pattern.permute.xlu0 7
  %342 = vperm.xlu0 %341, %v20
  %v343 = vpop.permute.xlu0 %342
  %v345 = vadd.f32 %v340, %v343
  %v346 = vmax.f32 %v345, 0.0
  %v347 = vand.u32 2147483647, %v345
  %v348 = vsub.f32 0.0, %v347
  %v349 = vmul.f32 %v348, 1.442695
  %v350 = vpow.pop %v349
  %v351 = vadd.f32 %v350, 1.0
  %v352 = vlog2.pop %v351
  %v353 = vmul.f32 %v352, 0.6931472
  %v354 = vadd.f32 %v346, %v353
  %v355 = vmul.f32 %v35, %v345
  %v356 = vsub.f32 %v354, %v355
  %s357 = sadd.s32 %s28, 0
  %v358 = vstv %s357
  %v359 = vadd.s32 %v30, %v358
  %vm360 = vcmp.lt.s32.totalorder %v359, 16
  %v361 = vsel %vm360, %v356, 0.0
  %v362 = vadd.f32 %v361, 0.0
  %vm363 = vcmask 1040384
  %v364 = vsel %vm363, %v362, 0.0
  %365 = vadd.xlane.f32.xlu0 %v364
  %v366 = vpop.xlane.xlu0 %365
  %367 = vst [vmem:[%s5] sm:$0x1] %v366
  // Predicated region
  $region22: #{bce_ranking_loss.1} parent=0 // pred_check
    _
  $region23: #{bce_ranking_loss.1} parent=0 // pred_check_branch
    %369 = sbr.rel (0) target = $region25
  $region24: #{bce_ranking_loss.1} parent=0 // pred_region
    _
  $region25: #{bce_ranking_loss.1} parent=0 // pred_fallthru
    _
  // Predicated region
  $region26: #{bce_ranking_loss.1} parent=0 // pred_check
    _
  $region27: #{bce_ranking_loss.1} parent=0 // pred_check_branch
    %371 = sbr.rel (0) target = $region29
  $region28: #{bce_ranking_loss.1} parent=0 // pred_region
    _
  $region29: #{bce_ranking_loss.1} parent=0 // pred_fallthru
    _

</llo_original>
